<compile_context>
chip_gen: v7x
topology: tpu7x:2x2x1
jax: 0.10.0
libtpu: 0.0.40
codegen_flags: <defaults>
</compile_context>

<pallas_src>
import math

import jax
import jax.numpy as jnp
from jax.experimental import pallas as pl
from jax.experimental.pallas import tpu as pltpu

_EPS = 1e-5            # nn.BatchNorm1d default
_NEG_SLOPE = 0.01      # nn.LeakyReLU default
_LANE = 128


def _round_up(n, m):
    return ((n + m - 1) // m) * m


def _leaky_relu(x):
    return jnp.where(x >= 0, x, _NEG_SLOPE * x)


def _bn_train_folded(h, gamma, beta):
    """Train-mode BatchNorm1d folded into a single per-feature scale/shift.

    h: [B, P] f32 (padded lanes are all-zero -> their gamma/beta are zero too,
    so padded outputs stay exactly zero).
    """
    mu = jnp.mean(h, axis=0, keepdims=True)
    msq = jnp.mean(h * h, axis=0, keepdims=True)
    var = jnp.maximum(msq - mu * mu, 0.0)          # f32, clamped
    s = gamma * jax.lax.rsqrt(var + _EPS)
    t = beta - mu * s
    return h * s + t


def _make_fused_kernel(has_head, block_has_resize):
    """Build a kernel for a static resnet config (blocks unrolled at trace time)."""

    def kernel(*refs):
        x_ref = refs[0]
        o_ref = refs[-1]
        it = iter(refs[1:-1])                      # packed weights / gammas / betas

        def mm(a_f32, w_ref):
            # bf16 inputs -> full-rate MXU, f32 accumulation.
            return jnp.dot(a_f32.astype(jnp.bfloat16), w_ref[...],
                           preferred_element_type=jnp.float32)

        h = x_ref[...].astype(jnp.float32)         # [B, P]

        if has_head:                               # head: Linear + BN (no activation)
            w = next(it); g = next(it); b = next(it)
            h = _bn_train_folded(mm(h, w), g[...], b[...])

        for has_resize in block_has_resize:        # BasicBlocks (unrolled)
            x_in = h
            w1 = next(it); g1 = next(it); b1 = next(it)
            w2 = next(it); g2 = next(it); b2 = next(it)
            if has_resize:
                wr = next(it); gr = next(it); br = next(it)

            hh = _bn_train_folded(mm(x_in, w1), g1[...], b1[...])
            hh = _leaky_relu(hh)
            # dropout = 0.0 -> no dropout branch
            hh = _bn_train_folded(mm(hh, w2), g2[...], b2[...])

            if has_resize:
                identity = _bn_train_folded(mm(x_in, wr), gr[...], br[...])
            else:
                identity = x_in
            h = _leaky_relu(hh + identity)

        o_ref[...] = h.astype(o_ref.dtype)

    return kernel


def _pack_params(raw, P):
    """One-time parameter prep: transpose, pad to [P, P] / [1, P], cast weights to
    bf16.  Linear biases are intentionally NOT packed (cancelled by train-mode BN)."""

    def pack_w(w):                                 # PyTorch [out, in] -> [P, P] bf16
        out_d, in_d = w.shape
        wp = jnp.zeros((P, P), jnp.bfloat16)
        return wp.at[:in_d, :out_d].set(w.T.astype(jnp.bfloat16))

    def pack_v(v):                                 # [d] -> [1, P] f32
        vp = jnp.zeros((1, P), jnp.float32)
        return vp.at[0, : v.shape[0]].set(v.astype(jnp.float32))

    packed = []
    if raw["head"] is not None:
        hd = raw["head"]
        packed += [pack_w(hd["w"]), pack_v(hd["gamma"]), pack_v(hd["beta"])]
    for blk in raw["blocks"]:
        packed += [pack_w(blk["w1"]), pack_v(blk["gamma1"]), pack_v(blk["beta1"]),
                   pack_w(blk["w2"]), pack_v(blk["gamma2"]), pack_v(blk["beta2"])]
        if "wr" in blk:
            packed += [pack_w(blk["wr"]), pack_v(blk["gammar"]), pack_v(blk["betar"])]
    return packed


def _embed_and_concat(X, emb_tables, cat_col_idx, cont_col_idx):
    """DeepDenseResnet input prep: embedding lookups + continuous columns (plain JAX)."""
    parts = []
    if emb_tables:
        for tab, col in zip(emb_tables, cat_col_idx):
            parts.append(tab[X[:, col].astype(jnp.int32)])
    if cont_col_idx:
        parts.append(X[:, jnp.asarray(cont_col_idx)].astype(jnp.float32))
    return jnp.concatenate(parts, axis=1)


def build_deep_dense_resnet(input_dim, blocks, raw_params,
                            emb_tables, cat_col_idx, cont_col_idx):
    has_head = input_dim != blocks[0]
    block_has_resize = tuple(blocks[i - 1] != blocks[i] for i in range(1, len(blocks)))
    P = _round_up(max([input_dim] + list(blocks)), _LANE)

    packed = _pack_params(raw_params, P)           # hoisted, one-time prep
    kernel = _make_fused_kernel(has_head, block_has_resize)
    out_dim = blocks[-1]
    param_bytes = sum(int(p.size) * p.dtype.itemsize for p in packed)
    vmem_spec = pl.BlockSpec(memory_space=pltpu.MemorySpace.VMEM)

    def forward(X):
        x = _embed_and_concat(X, emb_tables, cat_col_idx, cont_col_idx)
        B = x.shape[0]
        # Lane-dense, zero-padded [B, P] input (padded features stay exactly zero
        # through the whole stack since padded weights/gamma/beta are zero).
        xp = jnp.zeros((B, P), jnp.float32).at[:, : x.shape[1]].set(x)

        act_bytes = B * P * 4
        # Guard: whole-batch-resident BN; large batches would need a two-phase grid.
        if param_bytes + 8 * act_bytes > 40 * 1024 * 1024:
            raise NotImplementedError("batch too large for VMEM-resident BN")
        vmem_limit = int(min(max(16 * 1024 * 1024, 2 * (param_bytes + 6 * act_bytes)),
                             48 * 1024 * 1024))    # stays under v7x's 64 MiB physical

        y = pl.pallas_call(
            kernel,
            out_shape=jax.ShapeDtypeStruct((B, P), jnp.float32),
            in_specs=[vmem_spec] * (1 + len(packed)),
            out_specs=vmem_spec,
            compiler_params=pltpu.CompilerParams(vmem_limit_bytes=vmem_limit),
        )(xp, *packed)
        return y[:, :out_dim]

    return jax.jit(forward)


# ----------------------------------------------------------------------------- #
# Deterministic init (PyTorch layouts) and a pure-JAX f32 reference (with biases)
# ----------------------------------------------------------------------------- #
def _init_raw_params(key, input_dim, blocks):
    def linear(k, out_d, in_d):
        k1, k2 = jax.random.split(k)
        bound = 1.0 / math.sqrt(in_d)
        w = jax.random.uniform(k1, (out_d, in_d), jnp.float32, -bound, bound)
        b = jax.random.uniform(k2, (out_d,), jnp.float32, -bound, bound)
        return w, b

    def bn(k, d):
        k1, k2 = jax.random.split(k)
        # PyTorch defaults are gamma=1, beta=0; use non-trivial learnable values
        # so the parity check exercises the full BN fold.
        return (jax.random.uniform(k1, (d,), jnp.float32, 0.5, 1.5),
                0.1 * jax.random.normal(k2, (d,), jnp.float32))

    n_keys = 2 + 6 * (len(blocks) - 1)
    keys = iter(jax.random.split(key, n_keys))
    params = {"head": None, "blocks": []}

    if input_dim != blocks[0]:
        w, b = linear(next(keys), blocks[0], input_dim)
        g, be = bn(next(keys), blocks[0])
        params["head"] = {"w": w, "b": b, "gamma": g, "beta": be}

    for i in range(1, len(blocks)):
        inp, out = blocks[i - 1], blocks[i]
        blk = {}
        blk["w1"], blk["b1"] = linear(next(keys), out, inp)
        blk["gamma1"], blk["beta1"] = bn(next(keys), out)
        blk["w2"], blk["b2"] = linear(next(keys), out, out)
        blk["gamma2"], blk["beta2"] = bn(next(keys), out)
        if inp != out:
            blk["wr"], blk["br"] = linear(next(keys), out, inp)
            blk["gammar"], blk["betar"] = bn(next(keys), out)
        params["blocks"].append(blk)
    return params


def _reference_forward(X, raw_params, emb_tables, cat_col_idx, cont_col_idx,
                       input_dim, blocks):
    """PyTorch-parity forward in f32 (biases included, two-pass batch variance)."""
    x = _embed_and_concat(X, emb_tables, cat_col_idx, cont_col_idx)

    def bn(h, g, b):
        mu = h.mean(0, keepdims=True)
        var = ((h - mu) ** 2).mean(0, keepdims=True)
        return (h - mu) / jnp.sqrt(var + _EPS) * g + b

    def leaky(h):
        return jnp.where(h >= 0, h, _NEG_SLOPE * h)

    p = raw_params
    if input_dim != blocks[0]:
        hd = p["head"]
        x = bn(x @ hd["w"].T + hd["b"], hd["gamma"], hd["beta"])
    for blk in p["blocks"]:
        identity = x
        h = bn(x @ blk["w1"].T + blk["b1"], blk["gamma1"], blk["beta1"])
        h = leaky(h)
        h = bn(h @ blk["w2"].T + blk["b2"], blk["gamma2"], blk["beta2"])
        if "wr" in blk:
            identity = bn(x @ blk["wr"].T + blk["br"], blk["gammar"], blk["betar"])
        x = leaky(h + identity)
    return x


if __name__ == "__main__":
    # Small config consistent with the module's docstring example:
    #   4 categorical columns (4 uniques each, emb dim 8) + 1 continuous column
    #     -> input_dim = 4*8 + 1 = 33
    #   blocks = [16, 16, 8] exercises the head (33 != 16), a resize-free block
    #   (16 -> 16) and a resize block (16 -> 8).
    B = 8
    n_cat, n_uniq, emb_dim = 4, 4, 8
    blocks = [16, 16, 8]
    input_dim = n_cat * emb_dim + 1

    key = jax.random.PRNGKey(0)
    kx, kc, ke, kp = jax.random.split(key, 4)

    X_cat = jax.random.randint(kx, (B, n_cat), 0, n_uniq).astype(jnp.float32)
    X_cont = jax.random.uniform(kc, (B, 1), jnp.float32)
    X = jnp.concatenate([X_cat, X_cont], axis=1)            # [B, 5]

    emb_tables = [jax.random.normal(k, (n_uniq, emb_dim), jnp.float32)
                  for k in jax.random.split(ke, n_cat)]
    cat_col_idx = list(range(n_cat))
    cont_col_idx = [n_cat]

    raw_params = _init_raw_params(kp, input_dim, blocks)

    model = build_deep_dense_resnet(input_dim, blocks, raw_params,
                                    emb_tables, cat_col_idx, cont_col_idx)
    y = jax.block_until_ready(model(X))

    y_ref = _reference_forward(X, raw_params, emb_tables, cat_col_idx,
                               cont_col_idx, input_dim, blocks)
    assert y.shape == (B, blocks[-1]), y.shape
    # bf16 MXU inputs (f32 reference) across 6 BN stages -> loosened tolerance.
    max_err = float(jnp.max(jnp.abs(y - y_ref)))
    assert jnp.allclose(y, y_ref, atol=1e-1, rtol=1e-1), f"max abs err {max_err}"
    print("KERNEL_OK")
</pallas_src>

<mosaic_0001>
module attributes {stable_mosaic.version = 11 : i64} {
  func.func @kernel(%arg0: memref<8x128xf32, #tpu.memory_space<vmem>>, %arg1: memref<128x128xbf16, #tpu.memory_space<vmem>>, %arg2: memref<1x128xf32, #tpu.memory_space<vmem>>, %arg3: memref<1x128xf32, #tpu.memory_space<vmem>>, %arg4: memref<128x128xbf16, #tpu.memory_space<vmem>>, %arg5: memref<1x128xf32, #tpu.memory_space<vmem>>, %arg6: memref<1x128xf32, #tpu.memory_space<vmem>>, %arg7: memref<128x128xbf16, #tpu.memory_space<vmem>>, %arg8: memref<1x128xf32, #tpu.memory_space<vmem>>, %arg9: memref<1x128xf32, #tpu.memory_space<vmem>>, %arg10: memref<128x128xbf16, #tpu.memory_space<vmem>>, %arg11: memref<1x128xf32, #tpu.memory_space<vmem>>, %arg12: memref<1x128xf32, #tpu.memory_space<vmem>>, %arg13: memref<128x128xbf16, #tpu.memory_space<vmem>>, %arg14: memref<1x128xf32, #tpu.memory_space<vmem>>, %arg15: memref<1x128xf32, #tpu.memory_space<vmem>>, %arg16: memref<128x128xbf16, #tpu.memory_space<vmem>>, %arg17: memref<1x128xf32, #tpu.memory_space<vmem>>, %arg18: memref<1x128xf32, #tpu.memory_space<vmem>>, %arg19: memref<8x128xf32, #tpu.memory_space<vmem>>) attributes {dimension_semantics = [], scalar_prefetch = 0 : i64, scratch_operands = 0 : i64, tpu.core_type = #tpu.core_type<tc>} {
    %c0 = arith.constant 0 : index
    %c0_0 = arith.constant 0 : index
    %0 = vector.load %arg0[%c0, %c0_0] : memref<8x128xf32, #tpu.memory_space<vmem>>, vector<8x128xf32>
    %1 = arith.truncf %0 : vector<8x128xf32> to vector<8x128xbf16>
    %c0_1 = arith.constant 0 : index
    %c0_2 = arith.constant 0 : index
    %2 = vector.load %arg1[%c0_1, %c0_2] : memref<128x128xbf16, #tpu.memory_space<vmem>>, vector<128x128xbf16>
    %cst = arith.constant dense<0.000000e+00> : vector<8x128xf32>
    %3 = tpu.matmul %1, %2, %cst {dimension_numbers = #tpu.dot_dimension_numbers<[1], [0], [0], [1], [0, 0, 1, 1], [], []>} : vector<8x128xbf16>, vector<128x128xbf16>, vector<8x128xf32> -> vector<8x128xf32>
    %c0_3 = arith.constant 0 : index
    %c0_4 = arith.constant 0 : index
    %4 = vector.load %arg2[%c0_3, %c0_4] : memref<1x128xf32, #tpu.memory_space<vmem>>, vector<1x128xf32>
    %c0_5 = arith.constant 0 : index
    %c0_6 = arith.constant 0 : index
    %5 = vector.load %arg3[%c0_5, %c0_6] : memref<1x128xf32, #tpu.memory_space<vmem>>, vector<1x128xf32>
    %cst_7 = arith.constant dense<0.000000e+00> : vector<128xf32>
    %6 = vector.multi_reduction <add>, %3, %cst_7 [0] : vector<8x128xf32> to vector<128xf32>
    %7 = vector.shape_cast %6 : vector<128xf32> to vector<1x128xf32>
    %cst_8 = arith.constant 8.000000e+00 : f32
    %8 = vector.broadcast %cst_8 : f32 to vector<1x128xf32>
    %9 = arith.divf %7, %8 : vector<1x128xf32>
    %10 = arith.mulf %3, %3 : vector<8x128xf32>
    %cst_9 = arith.constant dense<0.000000e+00> : vector<128xf32>
    %11 = vector.multi_reduction <add>, %10, %cst_9 [0] : vector<8x128xf32> to vector<128xf32>
    %12 = vector.shape_cast %11 : vector<128xf32> to vector<1x128xf32>
    %cst_10 = arith.constant 8.000000e+00 : f32
    %13 = vector.broadcast %cst_10 : f32 to vector<1x128xf32>
    %14 = arith.divf %12, %13 : vector<1x128xf32>
    %15 = arith.mulf %9, %9 : vector<1x128xf32>
    %16 = arith.subf %14, %15 : vector<1x128xf32>
    %cst_11 = arith.constant 0.000000e+00 : f32
    %17 = vector.broadcast %cst_11 : f32 to vector<1x128xf32>
    %18 = arith.maximumf %16, %17 : vector<1x128xf32>
    %cst_12 = arith.constant 9.99999974E-6 : f32
    %19 = vector.broadcast %cst_12 : f32 to vector<1x128xf32>
    %20 = arith.addf %18, %19 : vector<1x128xf32>
    %21 = math.rsqrt %20 : vector<1x128xf32>
    %22 = arith.mulf %4, %21 : vector<1x128xf32>
    %23 = arith.mulf %9, %22 : vector<1x128xf32>
    %24 = arith.subf %5, %23 : vector<1x128xf32>
    %25 = vector.broadcast %22 : vector<1x128xf32> to vector<8x128xf32>
    %26 = arith.mulf %3, %25 : vector<8x128xf32>
    %27 = vector.broadcast %24 : vector<1x128xf32> to vector<8x128xf32>
    %28 = arith.addf %26, %27 : vector<8x128xf32>
    %29 = arith.truncf %28 : vector<8x128xf32> to vector<8x128xbf16>
    %c0_13 = arith.constant 0 : index
    %c0_14 = arith.constant 0 : index
    %30 = vector.load %arg4[%c0_13, %c0_14] : memref<128x128xbf16, #tpu.memory_space<vmem>>, vector<128x128xbf16>
    %cst_15 = arith.constant dense<0.000000e+00> : vector<8x128xf32>
    %31 = tpu.matmul %29, %30, %cst_15 {dimension_numbers = #tpu.dot_dimension_numbers<[1], [0], [0], [1], [0, 0, 1, 1], [], []>} : vector<8x128xbf16>, vector<128x128xbf16>, vector<8x128xf32> -> vector<8x128xf32>
    %c0_16 = arith.constant 0 : index
    %c0_17 = arith.constant 0 : index
    %32 = vector.load %arg5[%c0_16, %c0_17] : memref<1x128xf32, #tpu.memory_space<vmem>>, vector<1x128xf32>
    %c0_18 = arith.constant 0 : index
    %c0_19 = arith.constant 0 : index
    %33 = vector.load %arg6[%c0_18, %c0_19] : memref<1x128xf32, #tpu.memory_space<vmem>>, vector<1x128xf32>
    %cst_20 = arith.constant dense<0.000000e+00> : vector<128xf32>
    %34 = vector.multi_reduction <add>, %31, %cst_20 [0] : vector<8x128xf32> to vector<128xf32>
    %35 = vector.shape_cast %34 : vector<128xf32> to vector<1x128xf32>
    %cst_21 = arith.constant 8.000000e+00 : f32
    %36 = vector.broadcast %cst_21 : f32 to vector<1x128xf32>
    %37 = arith.divf %35, %36 : vector<1x128xf32>
    %38 = arith.mulf %31, %31 : vector<8x128xf32>
    %cst_22 = arith.constant dense<0.000000e+00> : vector<128xf32>
    %39 = vector.multi_reduction <add>, %38, %cst_22 [0] : vector<8x128xf32> to vector<128xf32>
    %40 = vector.shape_cast %39 : vector<128xf32> to vector<1x128xf32>
    %cst_23 = arith.constant 8.000000e+00 : f32
    %41 = vector.broadcast %cst_23 : f32 to vector<1x128xf32>
    %42 = arith.divf %40, %41 : vector<1x128xf32>
    %43 = arith.mulf %37, %37 : vector<1x128xf32>
    %44 = arith.subf %42, %43 : vector<1x128xf32>
    %cst_24 = arith.constant 0.000000e+00 : f32
    %45 = vector.broadcast %cst_24 : f32 to vector<1x128xf32>
    %46 = arith.maximumf %44, %45 : vector<1x128xf32>
    %cst_25 = arith.constant 9.99999974E-6 : f32
    %47 = vector.broadcast %cst_25 : f32 to vector<1x128xf32>
    %48 = arith.addf %46, %47 : vector<1x128xf32>
    %49 = math.rsqrt %48 : vector<1x128xf32>
    %50 = arith.mulf %32, %49 : vector<1x128xf32>
    %51 = arith.mulf %37, %50 : vector<1x128xf32>
    %52 = arith.subf %33, %51 : vector<1x128xf32>
    %53 = vector.broadcast %50 : vector<1x128xf32> to vector<8x128xf32>
    %54 = arith.mulf %31, %53 : vector<8x128xf32>
    %55 = vector.broadcast %52 : vector<1x128xf32> to vector<8x128xf32>
    %56 = arith.addf %54, %55 : vector<8x128xf32>
    %cst_26 = arith.constant 0.000000e+00 : f32
    %57 = vector.broadcast %cst_26 : f32 to vector<8x128xf32>
    %58 = arith.cmpf oge, %56, %57 : vector<8x128xf32>
    %cst_27 = arith.constant 0.00999999977 : f32
    %59 = vector.broadcast %cst_27 : f32 to vector<8x128xf32>
    %60 = arith.mulf %59, %56 : vector<8x128xf32>
    %61 = arith.select %58, %56, %60 : vector<8x128xi1>, vector<8x128xf32>
    %62 = arith.truncf %61 : vector<8x128xf32> to vector<8x128xbf16>
    %c0_28 = arith.constant 0 : index
    %c0_29 = arith.constant 0 : index
    %63 = vector.load %arg7[%c0_28, %c0_29] : memref<128x128xbf16, #tpu.memory_space<vmem>>, vector<128x128xbf16>
    %cst_30 = arith.constant dense<0.000000e+00> : vector<8x128xf32>
    %64 = tpu.matmul %62, %63, %cst_30 {dimension_numbers = #tpu.dot_dimension_numbers<[1], [0], [0], [1], [0, 0, 1, 1], [], []>} : vector<8x128xbf16>, vector<128x128xbf16>, vector<8x128xf32> -> vector<8x128xf32>
    %c0_31 = arith.constant 0 : index
    %c0_32 = arith.constant 0 : index
    %65 = vector.load %arg8[%c0_31, %c0_32] : memref<1x128xf32, #tpu.memory_space<vmem>>, vector<1x128xf32>
    %c0_33 = arith.constant 0 : index
    %c0_34 = arith.constant 0 : index
    %66 = vector.load %arg9[%c0_33, %c0_34] : memref<1x128xf32, #tpu.memory_space<vmem>>, vector<1x128xf32>
    %cst_35 = arith.constant dense<0.000000e+00> : vector<128xf32>
    %67 = vector.multi_reduction <add>, %64, %cst_35 [0] : vector<8x128xf32> to vector<128xf32>
    %68 = vector.shape_cast %67 : vector<128xf32> to vector<1x128xf32>
    %cst_36 = arith.constant 8.000000e+00 : f32
    %69 = vector.broadcast %cst_36 : f32 to vector<1x128xf32>
    %70 = arith.divf %68, %69 : vector<1x128xf32>
    %71 = arith.mulf %64, %64 : vector<8x128xf32>
    %cst_37 = arith.constant dense<0.000000e+00> : vector<128xf32>
    %72 = vector.multi_reduction <add>, %71, %cst_37 [0] : vector<8x128xf32> to vector<128xf32>
    %73 = vector.shape_cast %72 : vector<128xf32> to vector<1x128xf32>
    %cst_38 = arith.constant 8.000000e+00 : f32
    %74 = vector.broadcast %cst_38 : f32 to vector<1x128xf32>
    %75 = arith.divf %73, %74 : vector<1x128xf32>
    %76 = arith.mulf %70, %70 : vector<1x128xf32>
    %77 = arith.subf %75, %76 : vector<1x128xf32>
    %cst_39 = arith.constant 0.000000e+00 : f32
    %78 = vector.broadcast %cst_39 : f32 to vector<1x128xf32>
    %79 = arith.maximumf %77, %78 : vector<1x128xf32>
    %cst_40 = arith.constant 9.99999974E-6 : f32
    %80 = vector.broadcast %cst_40 : f32 to vector<1x128xf32>
    %81 = arith.addf %79, %80 : vector<1x128xf32>
    %82 = math.rsqrt %81 : vector<1x128xf32>
    %83 = arith.mulf %65, %82 : vector<1x128xf32>
    %84 = arith.mulf %70, %83 : vector<1x128xf32>
    %85 = arith.subf %66, %84 : vector<1x128xf32>
    %86 = vector.broadcast %83 : vector<1x128xf32> to vector<8x128xf32>
    %87 = arith.mulf %64, %86 : vector<8x128xf32>
    %88 = vector.broadcast %85 : vector<1x128xf32> to vector<8x128xf32>
    %89 = arith.addf %87, %88 : vector<8x128xf32>
    %90 = arith.addf %89, %28 : vector<8x128xf32>
    %cst_41 = arith.constant 0.000000e+00 : f32
    %91 = vector.broadcast %cst_41 : f32 to vector<8x128xf32>
    %92 = arith.cmpf oge, %90, %91 : vector<8x128xf32>
    %cst_42 = arith.constant 0.00999999977 : f32
    %93 = vector.broadcast %cst_42 : f32 to vector<8x128xf32>
    %94 = arith.mulf %93, %90 : vector<8x128xf32>
    %95 = arith.select %92, %90, %94 : vector<8x128xi1>, vector<8x128xf32>
    %96 = arith.truncf %95 : vector<8x128xf32> to vector<8x128xbf16>
    %c0_43 = arith.constant 0 : index
    %c0_44 = arith.constant 0 : index
    %97 = vector.load %arg10[%c0_43, %c0_44] : memref<128x128xbf16, #tpu.memory_space<vmem>>, vector<128x128xbf16>
    %cst_45 = arith.constant dense<0.000000e+00> : vector<8x128xf32>
    %98 = tpu.matmul %96, %97, %cst_45 {dimension_numbers = #tpu.dot_dimension_numbers<[1], [0], [0], [1], [0, 0, 1, 1], [], []>} : vector<8x128xbf16>, vector<128x128xbf16>, vector<8x128xf32> -> vector<8x128xf32>
    %c0_46 = arith.constant 0 : index
    %c0_47 = arith.constant 0 : index
    %99 = vector.load %arg11[%c0_46, %c0_47] : memref<1x128xf32, #tpu.memory_space<vmem>>, vector<1x128xf32>
    %c0_48 = arith.constant 0 : index
    %c0_49 = arith.constant 0 : index
    %100 = vector.load %arg12[%c0_48, %c0_49] : memref<1x128xf32, #tpu.memory_space<vmem>>, vector<1x128xf32>
    %cst_50 = arith.constant dense<0.000000e+00> : vector<128xf32>
    %101 = vector.multi_reduction <add>, %98, %cst_50 [0] : vector<8x128xf32> to vector<128xf32>
    %102 = vector.shape_cast %101 : vector<128xf32> to vector<1x128xf32>
    %cst_51 = arith.constant 8.000000e+00 : f32
    %103 = vector.broadcast %cst_51 : f32 to vector<1x128xf32>
    %104 = arith.divf %102, %103 : vector<1x128xf32>
    %105 = arith.mulf %98, %98 : vector<8x128xf32>
    %cst_52 = arith.constant dense<0.000000e+00> : vector<128xf32>
    %106 = vector.multi_reduction <add>, %105, %cst_52 [0] : vector<8x128xf32> to vector<128xf32>
    %107 = vector.shape_cast %106 : vector<128xf32> to vector<1x128xf32>
    %cst_53 = arith.constant 8.000000e+00 : f32
    %108 = vector.broadcast %cst_53 : f32 to vector<1x128xf32>
    %109 = arith.divf %107, %108 : vector<1x128xf32>
    %110 = arith.mulf %104, %104 : vector<1x128xf32>
    %111 = arith.subf %109, %110 : vector<1x128xf32>
    %cst_54 = arith.constant 0.000000e+00 : f32
    %112 = vector.broadcast %cst_54 : f32 to vector<1x128xf32>
    %113 = arith.maximumf %111, %112 : vector<1x128xf32>
    %cst_55 = arith.constant 9.99999974E-6 : f32
    %114 = vector.broadcast %cst_55 : f32 to vector<1x128xf32>
    %115 = arith.addf %113, %114 : vector<1x128xf32>
    %116 = math.rsqrt %115 : vector<1x128xf32>
    %117 = arith.mulf %99, %116 : vector<1x128xf32>
    %118 = arith.mulf %104, %117 : vector<1x128xf32>
    %119 = arith.subf %100, %118 : vector<1x128xf32>
    %120 = vector.broadcast %117 : vector<1x128xf32> to vector<8x128xf32>
    %121 = arith.mulf %98, %120 : vector<8x128xf32>
    %122 = vector.broadcast %119 : vector<1x128xf32> to vector<8x128xf32>
    %123 = arith.addf %121, %122 : vector<8x128xf32>
    %cst_56 = arith.constant 0.000000e+00 : f32
    %124 = vector.broadcast %cst_56 : f32 to vector<8x128xf32>
    %125 = arith.cmpf oge, %123, %124 : vector<8x128xf32>
    %cst_57 = arith.constant 0.00999999977 : f32
    %126 = vector.broadcast %cst_57 : f32 to vector<8x128xf32>
    %127 = arith.mulf %126, %123 : vector<8x128xf32>
    %128 = arith.select %125, %123, %127 : vector<8x128xi1>, vector<8x128xf32>
    %129 = arith.truncf %128 : vector<8x128xf32> to vector<8x128xbf16>
    %c0_58 = arith.constant 0 : index
    %c0_59 = arith.constant 0 : index
    %130 = vector.load %arg13[%c0_58, %c0_59] : memref<128x128xbf16, #tpu.memory_space<vmem>>, vector<128x128xbf16>
    %cst_60 = arith.constant dense<0.000000e+00> : vector<8x128xf32>
    %131 = tpu.matmul %129, %130, %cst_60 {dimension_numbers = #tpu.dot_dimension_numbers<[1], [0], [0], [1], [0, 0, 1, 1], [], []>} : vector<8x128xbf16>, vector<128x128xbf16>, vector<8x128xf32> -> vector<8x128xf32>
    %c0_61 = arith.constant 0 : index
    %c0_62 = arith.constant 0 : index
    %132 = vector.load %arg14[%c0_61, %c0_62] : memref<1x128xf32, #tpu.memory_space<vmem>>, vector<1x128xf32>
    %c0_63 = arith.constant 0 : index
    %c0_64 = arith.constant 0 : index
    %133 = vector.load %arg15[%c0_63, %c0_64] : memref<1x128xf32, #tpu.memory_space<vmem>>, vector<1x128xf32>
    %cst_65 = arith.constant dense<0.000000e+00> : vector<128xf32>
    %134 = vector.multi_reduction <add>, %131, %cst_65 [0] : vector<8x128xf32> to vector<128xf32>
    %135 = vector.shape_cast %134 : vector<128xf32> to vector<1x128xf32>
    %cst_66 = arith.constant 8.000000e+00 : f32
    %136 = vector.broadcast %cst_66 : f32 to vector<1x128xf32>
    %137 = arith.divf %135, %136 : vector<1x128xf32>
    %138 = arith.mulf %131, %131 : vector<8x128xf32>
    %cst_67 = arith.constant dense<0.000000e+00> : vector<128xf32>
    %139 = vector.multi_reduction <add>, %138, %cst_67 [0] : vector<8x128xf32> to vector<128xf32>
    %140 = vector.shape_cast %139 : vector<128xf32> to vector<1x128xf32>
    %cst_68 = arith.constant 8.000000e+00 : f32
    %141 = vector.broadcast %cst_68 : f32 to vector<1x128xf32>
    %142 = arith.divf %140, %141 : vector<1x128xf32>
    %143 = arith.mulf %137, %137 : vector<1x128xf32>
    %144 = arith.subf %142, %143 : vector<1x128xf32>
    %cst_69 = arith.constant 0.000000e+00 : f32
    %145 = vector.broadcast %cst_69 : f32 to vector<1x128xf32>
    %146 = arith.maximumf %144, %145 : vector<1x128xf32>
    %cst_70 = arith.constant 9.99999974E-6 : f32
    %147 = vector.broadcast %cst_70 : f32 to vector<1x128xf32>
    %148 = arith.addf %146, %147 : vector<1x128xf32>
    %149 = math.rsqrt %148 : vector<1x128xf32>
    %150 = arith.mulf %132, %149 : vector<1x128xf32>
    %151 = arith.mulf %137, %150 : vector<1x128xf32>
    %152 = arith.subf %133, %151 : vector<1x128xf32>
    %153 = vector.broadcast %150 : vector<1x128xf32> to vector<8x128xf32>
    %154 = arith.mulf %131, %153 : vector<8x128xf32>
    %155 = vector.broadcast %152 : vector<1x128xf32> to vector<8x128xf32>
    %156 = arith.addf %154, %155 : vector<8x128xf32>
    %157 = arith.truncf %95 : vector<8x128xf32> to vector<8x128xbf16>
    %c0_71 = arith.constant 0 : index
    %c0_72 = arith.constant 0 : index
    %158 = vector.load %arg16[%c0_71, %c0_72] : memref<128x128xbf16, #tpu.memory_space<vmem>>, vector<128x128xbf16>
    %cst_73 = arith.constant dense<0.000000e+00> : vector<8x128xf32>
    %159 = tpu.matmul %157, %158, %cst_73 {dimension_numbers = #tpu.dot_dimension_numbers<[1], [0], [0], [1], [0, 0, 1, 1], [], []>} : vector<8x128xbf16>, vector<128x128xbf16>, vector<8x128xf32> -> vector<8x128xf32>
    %c0_74 = arith.constant 0 : index
    %c0_75 = arith.constant 0 : index
    %160 = vector.load %arg17[%c0_74, %c0_75] : memref<1x128xf32, #tpu.memory_space<vmem>>, vector<1x128xf32>
    %c0_76 = arith.constant 0 : index
    %c0_77 = arith.constant 0 : index
    %161 = vector.load %arg18[%c0_76, %c0_77] : memref<1x128xf32, #tpu.memory_space<vmem>>, vector<1x128xf32>
    %cst_78 = arith.constant dense<0.000000e+00> : vector<128xf32>
    %162 = vector.multi_reduction <add>, %159, %cst_78 [0] : vector<8x128xf32> to vector<128xf32>
    %163 = vector.shape_cast %162 : vector<128xf32> to vector<1x128xf32>
    %cst_79 = arith.constant 8.000000e+00 : f32
    %164 = vector.broadcast %cst_79 : f32 to vector<1x128xf32>
    %165 = arith.divf %163, %164 : vector<1x128xf32>
    %166 = arith.mulf %159, %159 : vector<8x128xf32>
    %cst_80 = arith.constant dense<0.000000e+00> : vector<128xf32>
    %167 = vector.multi_reduction <add>, %166, %cst_80 [0] : vector<8x128xf32> to vector<128xf32>
    %168 = vector.shape_cast %167 : vector<128xf32> to vector<1x128xf32>
    %cst_81 = arith.constant 8.000000e+00 : f32
    %169 = vector.broadcast %cst_81 : f32 to vector<1x128xf32>
    %170 = arith.divf %168, %169 : vector<1x128xf32>
    %171 = arith.mulf %165, %165 : vector<1x128xf32>
    %172 = arith.subf %170, %171 : vector<1x128xf32>
    %cst_82 = arith.constant 0.000000e+00 : f32
    %173 = vector.broadcast %cst_82 : f32 to vector<1x128xf32>
    %174 = arith.maximumf %172, %173 : vector<1x128xf32>
    %cst_83 = arith.constant 9.99999974E-6 : f32
    %175 = vector.broadcast %cst_83 : f32 to vector<1x128xf32>
    %176 = arith.addf %174, %175 : vector<1x128xf32>
    %177 = math.rsqrt %176 : vector<1x128xf32>
    %178 = arith.mulf %160, %177 : vector<1x128xf32>
    %179 = arith.mulf %165, %178 : vector<1x128xf32>
    %180 = arith.subf %161, %179 : vector<1x128xf32>
    %181 = vector.broadcast %178 : vector<1x128xf32> to vector<8x128xf32>
    %182 = arith.mulf %159, %181 : vector<8x128xf32>
    %183 = vector.broadcast %180 : vector<1x128xf32> to vector<8x128xf32>
    %184 = arith.addf %182, %183 : vector<8x128xf32>
    %185 = arith.addf %156, %184 : vector<8x128xf32>
    %cst_84 = arith.constant 0.000000e+00 : f32
    %186 = vector.broadcast %cst_84 : f32 to vector<8x128xf32>
    %187 = arith.cmpf oge, %185, %186 : vector<8x128xf32>
    %cst_85 = arith.constant 0.00999999977 : f32
    %188 = vector.broadcast %cst_85 : f32 to vector<8x128xf32>
    %189 = arith.mulf %188, %185 : vector<8x128xf32>
    %190 = arith.select %187, %185, %189 : vector<8x128xi1>, vector<8x128xf32>
    %c0_86 = arith.constant 0 : index
    %c0_87 = arith.constant 0 : index
    %191 = vector.load %arg19[%c0_86, %c0_87] : memref<8x128xf32, #tpu.memory_space<vmem>>, vector<8x128xf32>
    tpu.vector_store %arg19[%c0_86, %c0_87], %190 {strides = array<i32>} : memref<8x128xf32, #tpu.memory_space<vmem>>, vector<8x128xf32>,
    return
  }
}

</mosaic_0001>

<llo_original>
// kernel: forward.1
$region0: #{forward.1}
  #allocation0 [shape = 'u32[]', space=smem, size = 0x4, offset = 0x4, fixed_abs, tag = 'smem constant byte address 0x4 - core index']
  #allocation1 [shape = 'u32[144,128]{1,0:T(1,128)}', space=vmem, size = 0x12000, scoped, tag = 'internal scratch']
  %s0 = inlined_call_operand.vmem [shape: f32[8,128], index: 0, kind: input, shape index: {}]
  %s1 = inlined_call_operand.vmem [shape: bf16[128,128], index: 1, kind: input, shape index: {}]
  %s2 = inlined_call_operand.vmem [shape: f32[1,128], index: 2, kind: input, shape index: {}]
  %s3 = inlined_call_operand.vmem [shape: f32[1,128], index: 3, kind: input, shape index: {}]
  %s4 = inlined_call_operand.vmem [shape: bf16[128,128], index: 4, kind: input, shape index: {}]
  %s5 = inlined_call_operand.vmem [shape: f32[1,128], index: 5, kind: input, shape index: {}]
  %s6 = inlined_call_operand.vmem [shape: f32[1,128], index: 6, kind: input, shape index: {}]
  %s7 = inlined_call_operand.vmem [shape: bf16[128,128], index: 7, kind: input, shape index: {}]
  %s8 = inlined_call_operand.vmem [shape: f32[1,128], index: 8, kind: input, shape index: {}]
  %s9 = inlined_call_operand.vmem [shape: f32[1,128], index: 9, kind: input, shape index: {}]
  %s10 = inlined_call_operand.vmem [shape: bf16[128,128], index: 10, kind: input, shape index: {}]
  %s11 = inlined_call_operand.vmem [shape: f32[1,128], index: 11, kind: input, shape index: {}]
  %s12 = inlined_call_operand.vmem [shape: f32[1,128], index: 12, kind: input, shape index: {}]
  %s13 = inlined_call_operand.vmem [shape: bf16[128,128], index: 13, kind: input, shape index: {}]
  %s14 = inlined_call_operand.vmem [shape: f32[1,128], index: 14, kind: input, shape index: {}]
  %s15 = inlined_call_operand.vmem [shape: f32[1,128], index: 15, kind: input, shape index: {}]
  %s16 = inlined_call_operand.vmem [shape: bf16[128,128], index: 16, kind: input, shape index: {}]
  %s17 = inlined_call_operand.vmem [shape: f32[1,128], index: 17, kind: input, shape index: {}]
  %s18 = inlined_call_operand.vmem [shape: f32[1,128], index: 18, kind: input, shape index: {}]
  %s19 = inlined_call_operand.hbm [shape: f32[8,128], index: 19, kind: output, shape index: {}]
  %s20 = sld [smem:[#allocation0]]
  $region86: #{forward.1} parent=0
    _
  %s22 = ssub.s32 1, %s20
  %s23 = scalar_select 0, %s22, %s20
  $region1: #{forward.1} parent=0
    #allocation2 [shape = 'u8[4096]{0}', space=vmem, size = 0x1000, scoped, tag = 'output window, operand 0, single buffered']
    #allocation3 [shape = 's32[1]{0}', space=sflag, size = 0x4, scoped, tag = 'scoped memory for forward.1']
    %24 = vsyncpa [#allocation3], 0
    // Predicated region
    $region2: #{forward.1} parent=1 // pred_check
      _
    $region3: #{forward.1} parent=1 // pred_check_branch
      %26 = sbr.rel (0) target = $region5
    $region4: #{forward.1} parent=1 // pred_region
      _
    $region5: #{forward.1} parent=1 // pred_fallthru
      _
    // Predicated region
    $region6: #{forward.1} parent=1 // pred_check
      _
    $region7: #{forward.1} parent=1 // pred_check_branch
      %28 = sbr.rel (0) target = $region9
    $region8: #{forward.1} parent=1 // pred_region
      _
    $region9: #{forward.1} parent=1 // pred_fallthru
      _
    // Predicated region
    $region10: #{forward.1} parent=1 // pred_check
      _
    $region11: #{forward.1} parent=1 // pred_check_branch
      %30 = sbr.rel (0) target = $region13
    $region12: #{forward.1} parent=1 // pred_region
      _
    $region13: #{forward.1} parent=1 // pred_fallthru
      _
    // Predicated region
    $region14: #{forward.1} parent=1 // pred_check
      _
    $region15: #{forward.1} parent=1 // pred_check_branch
      %32 = sbr.rel (0) target = $region17
    $region16: #{forward.1} parent=1 // pred_region
      _
    $region17: #{forward.1} parent=1 // pred_fallthru
      _
    // Predicated region
    $region18: #{forward.1} parent=1 // pred_check
      _
    $region19: #{forward.1} parent=1 // pred_check_branch
      %34 = sbr.rel (0) target = $region21
    $region20: #{forward.1} parent=1 // pred_region
      _
    $region21: #{forward.1} parent=1 // pred_fallthru
      _
    // Predicated region
    $region22: #{forward.1} parent=1 // pred_check
      _
    $region23: #{forward.1} parent=1 // pred_check_branch
      %36 = sbr.rel (0) target = $region25
    $region24: #{forward.1} parent=1 // pred_region
      _
    $region25: #{forward.1} parent=1 // pred_fallthru
      _
    // Predicated region
    $region26: #{forward.1} parent=1 // pred_check
      _
    $region27: #{forward.1} parent=1 // pred_check_branch
      %38 = sbr.rel (0) target = $region29
    $region28: #{forward.1} parent=1 // pred_region
      _
    $region29: #{forward.1} parent=1 // pred_fallthru
      _
    // Predicated region
    $region30: #{forward.1} parent=1 // pred_check
      _
    $region31: #{forward.1} parent=1 // pred_check_branch
      %40 = sbr.rel (0) target = $region33
    $region32: #{forward.1} parent=1 // pred_region
      _
    $region33: #{forward.1} parent=1 // pred_fallthru
      _
    // Predicated region
    $region34: #{forward.1} parent=1 // pred_check
      _
    $region35: #{forward.1} parent=1 // pred_check_branch
      %42 = sbr.rel (0) target = $region37
    $region36: #{forward.1} parent=1 // pred_region
      _
    $region37: #{forward.1} parent=1 // pred_fallthru
      _
    // Predicated region
    $region38: #{forward.1} parent=1 // pred_check
      _
    $region39: #{forward.1} parent=1 // pred_check_branch
      %44 = sbr.rel (0) target = $region41
    $region40: #{forward.1} parent=1 // pred_region
      _
    $region41: #{forward.1} parent=1 // pred_fallthru
      _
    // Predicated region
    $region42: #{forward.1} parent=1 // pred_check
      _
    $region43: #{forward.1} parent=1 // pred_check_branch
      %46 = sbr.rel (0) target = $region45
    $region44: #{forward.1} parent=1 // pred_region
      _
    $region45: #{forward.1} parent=1 // pred_fallthru
      _
    // Predicated region
    $region46: #{forward.1} parent=1 // pred_check
      _
    $region47: #{forward.1} parent=1 // pred_check_branch
      %48 = sbr.rel (0) target = $region49
    $region48: #{forward.1} parent=1 // pred_region
      _
    $region49: #{forward.1} parent=1 // pred_fallthru
      _
    // Predicated region
    $region50: #{forward.1} parent=1 // pred_check
      _
    $region51: #{forward.1} parent=1 // pred_check_branch
      %50 = sbr.rel (0) target = $region53
    $region52: #{forward.1} parent=1 // pred_region
      _
    $region53: #{forward.1} parent=1 // pred_fallthru
      _
    // Predicated region
    $region54: #{forward.1} parent=1 // pred_check
      _
    $region55: #{forward.1} parent=1 // pred_check_branch
      %52 = sbr.rel (0) target = $region57
    $region56: #{forward.1} parent=1 // pred_region
      _
    $region57: #{forward.1} parent=1 // pred_fallthru
      _
    // Predicated region
    $region58: #{forward.1} parent=1 // pred_check
      _
    $region59: #{forward.1} parent=1 // pred_check_branch
      %54 = sbr.rel (0) target = $region61
    $region60: #{forward.1} parent=1 // pred_region
      _
    $region61: #{forward.1} parent=1 // pred_fallthru
      _
    // Predicated region
    $region62: #{forward.1} parent=1 // pred_check
      _
    $region63: #{forward.1} parent=1 // pred_check_branch
      %56 = sbr.rel (0) target = $region65
    $region64: #{forward.1} parent=1 // pred_region
      _
    $region65: #{forward.1} parent=1 // pred_fallthru
      _
    // Predicated region
    $region66: #{forward.1} parent=1 // pred_check
      _
    $region67: #{forward.1} parent=1 // pred_check_branch
      %58 = sbr.rel (0) target = $region69
    $region68: #{forward.1} parent=1 // pred_region
      _
    $region69: #{forward.1} parent=1 // pred_fallthru
      _
    // Predicated region
    $region70: #{forward.1} parent=1 // pred_check
      _
    $region71: #{forward.1} parent=1 // pred_check_branch
      %60 = sbr.rel (0) target = $region73
    $region72: #{forward.1} parent=1 // pred_region
      _
    $region73: #{forward.1} parent=1 // pred_fallthru
      _
    // Predicated region
    $region74: #{forward.1} parent=1 // pred_check
      _
    $region75: #{forward.1} parent=1 // pred_check_branch
      %62 = sbr.rel (0) target = $region77
    $region76: #{forward.1} parent=1 // pred_region
      _
    $region77: #{forward.1} parent=1 // pred_fallthru
      _
    %v64 = vld [vmem:[%s0] sm:$0xff]
    %v65 = vpack.c.bf16 %v64, %v64
    %v66 = vld [vmem:[%s1] sm:$0xf]
    %v67 = vld [vmem:[%s1 + $0x4] sm:$0xf]
    %v68 = vld [vmem:[%s1 + $0x8] sm:$0xf]
    %v69 = vld [vmem:[%s1 + $0xc] sm:$0xf]
    %v70 = vld [vmem:[%s1 + $0x10] sm:$0xf]
    %v71 = vld [vmem:[%s1 + $0x14] sm:$0xf]
    %v72 = vld [vmem:[%s1 + $0x18] sm:$0xf]
    %v73 = vld [vmem:[%s1 + $0x1c] sm:$0xf]
    %v74 = vld [vmem:[%s1 + $0x20] sm:$0xf]
    %v75 = vld [vmem:[%s1 + $0x24] sm:$0xf]
    %v76 = vld [vmem:[%s1 + $0x28] sm:$0xf]
    %v77 = vld [vmem:[%s1 + $0x2c] sm:$0xf]
    %v78 = vld [vmem:[%s1 + $0x30] sm:$0xf]
    %v79 = vld [vmem:[%s1 + $0x34] sm:$0xf]
    %v80 = vld [vmem:[%s1 + $0x38] sm:$0xf]
    %v81 = vld [vmem:[%s1 + $0x3c] sm:$0xf]
    %v98 = vunpack.c.l.b16 %v66
    %v99 = vunpack.c.l.b16 %v67
    %v100 = vunpack.c.l.b16 %v68
    %v101 = vunpack.c.l.b16 %v69
    %v102 = vunpack.c.l.b16 %v70
    %v103 = vunpack.c.l.b16 %v71
    %v104 = vunpack.c.l.b16 %v72
    %v105 = vunpack.c.l.b16 %v73
    %v106 = vunpack.c.l.b16 %v74
    %v107 = vunpack.c.l.b16 %v75
    %v108 = vunpack.c.l.b16 %v76
    %v109 = vunpack.c.l.b16 %v77
    %v110 = vunpack.c.l.b16 %v78
    %v111 = vunpack.c.l.b16 %v79
    %v112 = vunpack.c.l.b16 %v80
    %v113 = vunpack.c.l.b16 %v81
    %v114 = vpack.c.b16 %v99, %v98
    %v115 = vpack.c.b16 %v101, %v100
    %v116 = vpack.c.b16 %v103, %v102
    %v117 = vpack.c.b16 %v105, %v104
    %v118 = vpack.c.b16 %v107, %v106
    %v119 = vpack.c.b16 %v109, %v108
    %v120 = vpack.c.b16 %v111, %v110
    %v121 = vpack.c.b16 %v113, %v112
    %130 = vmatprep.subr.bf16.mxu0 0
    %131 = vmatpush1.bf16.msra.mxu0 %v114
    %132 = vmatprep.subr.bf16.mxu0 0
    %133 = vmatpush1.bf16.msra.mxu0 %v115
    %134 = vmatprep.subr.bf16.mxu0 0
    %135 = vmatpush1.bf16.msra.mxu0 %v116
    %136 = vmatprep.subr.bf16.mxu0 0
    %137 = vmatpush1.bf16.msra.mxu0 %v117
    %138 = vmatprep.subr.bf16.mxu0 0
    %139 = vmatpush1.bf16.msra.mxu0 %v118
    %140 = vmatprep.subr.bf16.mxu0 0
    %141 = vmatpush1.bf16.msra.mxu0 %v119
    %142 = vmatprep.subr.bf16.mxu0 0
    %143 = vmatpush1.bf16.msra.mxu0 %v120
    %144 = vmatprep.subr.bf16.mxu0 0
    %145 = vmatpush1.bf16.msra.mxu0 %v121
    %146 = vmatprep.subr.bf16.mxu0 0
    %147 = vmatpush1.bf16.msra.mxu0 0
    %148 = vmatprep.subr.bf16.mxu0 0
    %149 = vmatpush1.bf16.msra.mxu0 0
    %150 = vmatprep.subr.bf16.mxu0 0
    %151 = vmatpush1.bf16.msra.mxu0 0
    %152 = vmatprep.subr.bf16.mxu0 0
    %153 = vmatpush1.bf16.msra.mxu0 0
    %154 = vmatprep.subr.bf16.mxu0 0
    %155 = vmatpush1.bf16.msra.mxu0 0
    %156 = vmatprep.subr.bf16.mxu0 0
    %157 = vmatpush1.bf16.msra.mxu0 0
    %158 = vmatprep.subr.bf16.mxu0 0
    %159 = vmatpush1.bf16.msra.mxu0 0
    %160 = vmatprep.subr.bf16.mxu0 0
    %161 = vmatpush1.bf16.msra.mxu0 0
    %162 = vmatprep.mubr.bf16.mxu0 0
    %163 = vmatmul.mubr.bf16.gmra.mrb[0].mxu0 %v65
    %v164 = vpop.f32.mrb[0].mxu0
    %v165 = vadd.f32 0.0, %v164
    %v166 = vpop.f32.mrb[0].mxu0
    %v167 = vpop.f32.mrb[0].mxu0
    %v168 = vpop.f32.mrb[0].mxu0
    %169 = vdwg.mxu0
    %v170 = vld [vmem:[%s2] sm:$0x1]
    %v171 = vld [vmem:[%s3] sm:$0x1]
    %v172 = vrot.slane %v165, 4
    %v173 = vadd.f32 %v165, %v172
    %v174 = vrot.slane %v173, 2
    %v175 = vadd.f32 %v173, %v174
    %v176 = vrot.slane %v175, 1
    %v177 = vadd.f32 %v175, %v176
    %v178 = vrcp.pop 8.0
    %v179 = vmul.f32 %v177, %v178
    %v180 = vmul.f32 %v165, %v165
    %v181 = vrot.slane %v180, 4
    %v182 = vadd.f32 %v180, %v181
    %v183 = vrot.slane %v182, 2
    %v184 = vadd.f32 %v182, %v183
    %v185 = vrot.slane %v184, 1
    %v186 = vadd.f32 %v184, %v185
    %v187 = vmul.f32 %v186, %v178
    %v188 = vmul.f32 %v179, %v179
    %v189 = vsub.f32 %v187, %v188
    %v190 = vmax.f32 %v189, 0.0
    %v191 = vadd.f32 %v190, 1e-05
    %v192 = vrsqrt.pop %v191
    %v193 = vmul.f32 %v170, %v192
    %v194 = vmul.f32 %v179, %v193
    %v195 = vsub.f32 %v171, %v194
    %v197 = vlaneseq
    %v198 = vshrl.u32 %v197, 7
    %v199 = vsub.s32 0, %v198
    %v200 = vrot.slane %v193, %v199
    %v202 = vmul.f32 %v165, %v200
    %v204 = vlaneseq
    %v205 = vshrl.u32 %v204, 7
    %v206 = vsub.s32 0, %v205
    %v207 = vrot.slane %v195, %v206
    %v209 = vadd.f32 %v202, %v207
    %v210 = vpack.c.bf16 %v209, %v209
    %v211 = vld [vmem:[%s4] sm:$0xf]
    %v212 = vld [vmem:[%s4 + $0x4] sm:$0xf]
    %v213 = vld [vmem:[%s4 + $0x8] sm:$0xf]
    %v214 = vld [vmem:[%s4 + $0xc] sm:$0xf]
    %v215 = vld [vmem:[%s4 + $0x10] sm:$0xf]
    %v216 = vld [vmem:[%s4 + $0x14] sm:$0xf]
    %v217 = vld [vmem:[%s4 + $0x18] sm:$0xf]
    %v218 = vld [vmem:[%s4 + $0x1c] sm:$0xf]
    %v219 = vld [vmem:[%s4 + $0x20] sm:$0xf]
    %v220 = vld [vmem:[%s4 + $0x24] sm:$0xf]
    %v221 = vld [vmem:[%s4 + $0x28] sm:$0xf]
    %v222 = vld [vmem:[%s4 + $0x2c] sm:$0xf]
    %v223 = vld [vmem:[%s4 + $0x30] sm:$0xf]
    %v224 = vld [vmem:[%s4 + $0x34] sm:$0xf]
    %v225 = vld [vmem:[%s4 + $0x38] sm:$0xf]
    %v226 = vld [vmem:[%s4 + $0x3c] sm:$0xf]
    %v243 = vunpack.c.l.b16 %v211
    %v244 = vunpack.c.l.b16 %v212
    %v245 = vunpack.c.l.b16 %v213
    %v246 = vunpack.c.l.b16 %v214
    %v247 = vunpack.c.l.b16 %v215
    %v248 = vunpack.c.l.b16 %v216
    %v249 = vunpack.c.l.b16 %v217
    %v250 = vunpack.c.l.b16 %v218
    %v251 = vunpack.c.l.b16 %v219
    %v252 = vunpack.c.l.b16 %v220
    %v253 = vunpack.c.l.b16 %v221
    %v254 = vunpack.c.l.b16 %v222
    %v255 = vunpack.c.l.b16 %v223
    %v256 = vunpack.c.l.b16 %v224
    %v257 = vunpack.c.l.b16 %v225
    %v258 = vunpack.c.l.b16 %v226
    %v259 = vpack.c.b16 %v244, %v243
    %v260 = vpack.c.b16 %v246, %v245
    %v261 = vpack.c.b16 %v248, %v247
    %v262 = vpack.c.b16 %v250, %v249
    %v263 = vpack.c.b16 %v252, %v251
    %v264 = vpack.c.b16 %v254, %v253
    %v265 = vpack.c.b16 %v256, %v255
    %v266 = vpack.c.b16 %v258, %v257
    %275 = vmatprep.subr.bf16.mxu0 0
    %276 = vmatpush1.bf16.msra.mxu0 %v259
    %277 = vmatprep.subr.bf16.mxu0 0
    %278 = vmatpush1.bf16.msra.mxu0 %v260
    %279 = vmatprep.subr.bf16.mxu0 0
    %280 = vmatpush1.bf16.msra.mxu0 %v261
    %281 = vmatprep.subr.bf16.mxu0 0
    %282 = vmatpush1.bf16.msra.mxu0 %v262
    %283 = vmatprep.subr.bf16.mxu0 0
    %284 = vmatpush1.bf16.msra.mxu0 %v263
    %285 = vmatprep.subr.bf16.mxu0 0
    %286 = vmatpush1.bf16.msra.mxu0 %v264
    %287 = vmatprep.subr.bf16.mxu0 0
    %288 = vmatpush1.bf16.msra.mxu0 %v265
    %289 = vmatprep.subr.bf16.mxu0 0
    %290 = vmatpush1.bf16.msra.mxu0 %v266
    %291 = vmatprep.subr.bf16.mxu0 0
    %292 = vmatpush1.bf16.msra.mxu0 0
    %293 = vmatprep.subr.bf16.mxu0 0
    %294 = vmatpush1.bf16.msra.mxu0 0
    %295 = vmatprep.subr.bf16.mxu0 0
    %296 = vmatpush1.bf16.msra.mxu0 0
    %297 = vmatprep.subr.bf16.mxu0 0
    %298 = vmatpush1.bf16.msra.mxu0 0
    %299 = vmatprep.subr.bf16.mxu0 0
    %300 = vmatpush1.bf16.msra.mxu0 0
    %301 = vmatprep.subr.bf16.mxu0 0
    %302 = vmatpush1.bf16.msra.mxu0 0
    %303 = vmatprep.subr.bf16.mxu0 0
    %304 = vmatpush1.bf16.msra.mxu0 0
    %305 = vmatprep.subr.bf16.mxu0 0
    %306 = vmatpush1.bf16.msra.mxu0 0
    %307 = vmatprep.mubr.bf16.mxu0 0
    %308 = vmatmul.mubr.bf16.gmra.mrb[0].mxu0 %v210
    %v309 = vpop.f32.mrb[0].mxu0
    %v310 = vadd.f32 0.0, %v309
    %v311 = vpop.f32.mrb[0].mxu0
    %v312 = vpop.f32.mrb[0].mxu0
    %v313 = vpop.f32.mrb[0].mxu0
    %314 = vdwg.mxu0
    %v315 = vld [vmem:[%s5] sm:$0x1]
    %v316 = vld [vmem:[%s6] sm:$0x1]
    %v317 = vrot.slane %v310, 4
    %v318 = vadd.f32 %v310, %v317
    %v319 = vrot.slane %v318, 2
    %v320 = vadd.f32 %v318, %v319
    %v321 = vrot.slane %v320, 1
    %v322 = vadd.f32 %v320, %v321
    %v323 = vmul.f32 %v322, %v178
    %v324 = vmul.f32 %v310, %v310
    %v325 = vrot.slane %v324, 4
    %v326 = vadd.f32 %v324, %v325
    %v327 = vrot.slane %v326, 2
    %v328 = vadd.f32 %v326, %v327
    %v329 = vrot.slane %v328, 1
    %v330 = vadd.f32 %v328, %v329
    %v331 = vmul.f32 %v330, %v178
    %v332 = vmul.f32 %v323, %v323
    %v333 = vsub.f32 %v331, %v332
    %v334 = vmax.f32 %v333, 0.0
    %v335 = vadd.f32 %v334, 1e-05
    %v336 = vrsqrt.pop %v335
    %v337 = vmul.f32 %v315, %v336
    %v338 = vmul.f32 %v323, %v337
    %v339 = vsub.f32 %v316, %v338
    %v341 = vlaneseq
    %v342 = vshrl.u32 %v341, 7
    %v343 = vsub.s32 0, %v342
    %v344 = vrot.slane %v337, %v343
    %v346 = vmul.f32 %v310, %v344
    %v348 = vlaneseq
    %v349 = vshrl.u32 %v348, 7
    %v350 = vsub.s32 0, %v349
    %v351 = vrot.slane %v339, %v350
    %v353 = vadd.f32 %v346, %v351
    %vm354 = vcmp.ge.f32.partialorder %v353, 0.0
    %v355 = vmul.f32 %v353, 0.01
    %v356 = vsel %vm354, %v353, %v355
    %v357 = vpack.c.bf16 %v356, %v356
    %v358 = vld [vmem:[%s7] sm:$0xf]
    %v359 = vld [vmem:[%s7 + $0x4] sm:$0xf]
    %v360 = vld [vmem:[%s7 + $0x8] sm:$0xf]
    %v361 = vld [vmem:[%s7 + $0xc] sm:$0xf]
    %v362 = vld [vmem:[%s7 + $0x10] sm:$0xf]
    %v363 = vld [vmem:[%s7 + $0x14] sm:$0xf]
    %v364 = vld [vmem:[%s7 + $0x18] sm:$0xf]
    %v365 = vld [vmem:[%s7 + $0x1c] sm:$0xf]
    %v366 = vld [vmem:[%s7 + $0x20] sm:$0xf]
    %v367 = vld [vmem:[%s7 + $0x24] sm:$0xf]
    %v368 = vld [vmem:[%s7 + $0x28] sm:$0xf]
    %v369 = vld [vmem:[%s7 + $0x2c] sm:$0xf]
    %v370 = vld [vmem:[%s7 + $0x30] sm:$0xf]
    %v371 = vld [vmem:[%s7 + $0x34] sm:$0xf]
    %v372 = vld [vmem:[%s7 + $0x38] sm:$0xf]
    %v373 = vld [vmem:[%s7 + $0x3c] sm:$0xf]
    %v390 = vunpack.c.l.b16 %v358
    %v391 = vunpack.c.l.b16 %v359
    %v392 = vunpack.c.l.b16 %v360
    %v393 = vunpack.c.l.b16 %v361
    %v394 = vunpack.c.l.b16 %v362
    %v395 = vunpack.c.l.b16 %v363
    %v396 = vunpack.c.l.b16 %v364
    %v397 = vunpack.c.l.b16 %v365
    %v398 = vunpack.c.l.b16 %v366
    %v399 = vunpack.c.l.b16 %v367
    %v400 = vunpack.c.l.b16 %v368
    %v401 = vunpack.c.l.b16 %v369
    %v402 = vunpack.c.l.b16 %v370
    %v403 = vunpack.c.l.b16 %v371
    %v404 = vunpack.c.l.b16 %v372
    %v405 = vunpack.c.l.b16 %v373
    %v406 = vpack.c.b16 %v391, %v390
    %v407 = vpack.c.b16 %v393, %v392
    %v408 = vpack.c.b16 %v395, %v394
    %v409 = vpack.c.b16 %v397, %v396
    %v410 = vpack.c.b16 %v399, %v398
    %v411 = vpack.c.b16 %v401, %v400
    %v412 = vpack.c.b16 %v403, %v402
    %v413 = vpack.c.b16 %v405, %v404
    %422 = vmatprep.subr.bf16.mxu0 0
    %423 = vmatpush1.bf16.msra.mxu0 %v406
    %424 = vmatprep.subr.bf16.mxu0 0
    %425 = vmatpush1.bf16.msra.mxu0 %v407
    %426 = vmatprep.subr.bf16.mxu0 0
    %427 = vmatpush1.bf16.msra.mxu0 %v408
    %428 = vmatprep.subr.bf16.mxu0 0
    %429 = vmatpush1.bf16.msra.mxu0 %v409
    %430 = vmatprep.subr.bf16.mxu0 0
    %431 = vmatpush1.bf16.msra.mxu0 %v410
    %432 = vmatprep.subr.bf16.mxu0 0
    %433 = vmatpush1.bf16.msra.mxu0 %v411
    %434 = vmatprep.subr.bf16.mxu0 0
    %435 = vmatpush1.bf16.msra.mxu0 %v412
    %436 = vmatprep.subr.bf16.mxu0 0
    %437 = vmatpush1.bf16.msra.mxu0 %v413
    %438 = vmatprep.subr.bf16.mxu0 0
    %439 = vmatpush1.bf16.msra.mxu0 0
    %440 = vmatprep.subr.bf16.mxu0 0
    %441 = vmatpush1.bf16.msra.mxu0 0
    %442 = vmatprep.subr.bf16.mxu0 0
    %443 = vmatpush1.bf16.msra.mxu0 0
    %444 = vmatprep.subr.bf16.mxu0 0
    %445 = vmatpush1.bf16.msra.mxu0 0
    %446 = vmatprep.subr.bf16.mxu0 0
    %447 = vmatpush1.bf16.msra.mxu0 0
    %448 = vmatprep.subr.bf16.mxu0 0
    %449 = vmatpush1.bf16.msra.mxu0 0
    %450 = vmatprep.subr.bf16.mxu0 0
    %451 = vmatpush1.bf16.msra.mxu0 0
    %452 = vmatprep.subr.bf16.mxu0 0
    %453 = vmatpush1.bf16.msra.mxu0 0
    %454 = vmatprep.mubr.bf16.mxu0 0
    %455 = vmatmul.mubr.bf16.gmra.mrb[0].mxu0 %v357
    %v456 = vpop.f32.mrb[0].mxu0
    %v457 = vadd.f32 0.0, %v456
    %v458 = vpop.f32.mrb[0].mxu0
    %v459 = vpop.f32.mrb[0].mxu0
    %v460 = vpop.f32.mrb[0].mxu0
    %461 = vdwg.mxu0
    %v462 = vld [vmem:[%s8] sm:$0x1]
    %v463 = vld [vmem:[%s9] sm:$0x1]
    %v464 = vrot.slane %v457, 4
    %v465 = vadd.f32 %v457, %v464
    %v466 = vrot.slane %v465, 2
    %v467 = vadd.f32 %v465, %v466
    %v468 = vrot.slane %v467, 1
    %v469 = vadd.f32 %v467, %v468
    %v470 = vmul.f32 %v469, %v178
    %v471 = vmul.f32 %v457, %v457
    %v472 = vrot.slane %v471, 4
    %v473 = vadd.f32 %v471, %v472
    %v474 = vrot.slane %v473, 2
    %v475 = vadd.f32 %v473, %v474
    %v476 = vrot.slane %v475, 1
    %v477 = vadd.f32 %v475, %v476
    %v478 = vmul.f32 %v477, %v178
    %v479 = vmul.f32 %v470, %v470
    %v480 = vsub.f32 %v478, %v479
    %v481 = vmax.f32 %v480, 0.0
    %v482 = vadd.f32 %v481, 1e-05
    %v483 = vrsqrt.pop %v482
    %v484 = vmul.f32 %v462, %v483
    %v485 = vmul.f32 %v470, %v484
    %v486 = vsub.f32 %v463, %v485
    %v488 = vlaneseq
    %v489 = vshrl.u32 %v488, 7
    %v490 = vsub.s32 0, %v489
    %v491 = vrot.slane %v484, %v490
    %v493 = vmul.f32 %v457, %v491
    %v495 = vlaneseq
    %v496 = vshrl.u32 %v495, 7
    %v497 = vsub.s32 0, %v496
    %v498 = vrot.slane %v486, %v497
    %v500 = vadd.f32 %v493, %v498
    %v501 = vadd.f32 %v500, %v209
    %vm502 = vcmp.ge.f32.partialorder %v501, 0.0
    %v503 = vmul.f32 %v501, 0.01
    %v504 = vsel %vm502, %v501, %v503
    %v505 = vpack.c.bf16 %v504, %v504
    %v506 = vld [vmem:[%s10] sm:$0xf]
    %v507 = vld [vmem:[%s10 + $0x4] sm:$0xf]
    %v508 = vld [vmem:[%s10 + $0x8] sm:$0xf]
    %v509 = vld [vmem:[%s10 + $0xc] sm:$0xf]
    %v510 = vld [vmem:[%s10 + $0x10] sm:$0xf]
    %v511 = vld [vmem:[%s10 + $0x14] sm:$0xf]
    %v512 = vld [vmem:[%s10 + $0x18] sm:$0xf]
    %v513 = vld [vmem:[%s10 + $0x1c] sm:$0xf]
    %v514 = vld [vmem:[%s10 + $0x20] sm:$0xf]
    %v515 = vld [vmem:[%s10 + $0x24] sm:$0xf]
    %v516 = vld [vmem:[%s10 + $0x28] sm:$0xf]
    %v517 = vld [vmem:[%s10 + $0x2c] sm:$0xf]
    %v518 = vld [vmem:[%s10 + $0x30] sm:$0xf]
    %v519 = vld [vmem:[%s10 + $0x34] sm:$0xf]
    %v520 = vld [vmem:[%s10 + $0x38] sm:$0xf]
    %v521 = vld [vmem:[%s10 + $0x3c] sm:$0xf]
    %v538 = vunpack.c.l.b16 %v506
    %v539 = vunpack.c.l.b16 %v507
    %v540 = vunpack.c.l.b16 %v508
    %v541 = vunpack.c.l.b16 %v509
    %v542 = vunpack.c.l.b16 %v510
    %v543 = vunpack.c.l.b16 %v511
    %v544 = vunpack.c.l.b16 %v512
    %v545 = vunpack.c.l.b16 %v513
    %v546 = vunpack.c.l.b16 %v514
    %v547 = vunpack.c.l.b16 %v515
    %v548 = vunpack.c.l.b16 %v516
    %v549 = vunpack.c.l.b16 %v517
    %v550 = vunpack.c.l.b16 %v518
    %v551 = vunpack.c.l.b16 %v519
    %v552 = vunpack.c.l.b16 %v520
    %v553 = vunpack.c.l.b16 %v521
    %v554 = vpack.c.b16 %v539, %v538
    %v555 = vpack.c.b16 %v541, %v540
    %v556 = vpack.c.b16 %v543, %v542
    %v557 = vpack.c.b16 %v545, %v544
    %v558 = vpack.c.b16 %v547, %v546
    %v559 = vpack.c.b16 %v549, %v548
    %v560 = vpack.c.b16 %v551, %v550
    %v561 = vpack.c.b16 %v553, %v552
    %570 = vmatprep.subr.bf16.mxu0 0
    %571 = vmatpush1.bf16.msra.mxu0 %v554
    %572 = vmatprep.subr.bf16.mxu0 0
    %573 = vmatpush1.bf16.msra.mxu0 %v555
    %574 = vmatprep.subr.bf16.mxu0 0
    %575 = vmatpush1.bf16.msra.mxu0 %v556
    %576 = vmatprep.subr.bf16.mxu0 0
    %577 = vmatpush1.bf16.msra.mxu0 %v557
    %578 = vmatprep.subr.bf16.mxu0 0
    %579 = vmatpush1.bf16.msra.mxu0 %v558
    %580 = vmatprep.subr.bf16.mxu0 0
    %581 = vmatpush1.bf16.msra.mxu0 %v559
    %582 = vmatprep.subr.bf16.mxu0 0
    %583 = vmatpush1.bf16.msra.mxu0 %v560
    %584 = vmatprep.subr.bf16.mxu0 0
    %585 = vmatpush1.bf16.msra.mxu0 %v561
    %586 = vmatprep.subr.bf16.mxu0 0
    %587 = vmatpush1.bf16.msra.mxu0 0
    %588 = vmatprep.subr.bf16.mxu0 0
    %589 = vmatpush1.bf16.msra.mxu0 0
    %590 = vmatprep.subr.bf16.mxu0 0
    %591 = vmatpush1.bf16.msra.mxu0 0
    %592 = vmatprep.subr.bf16.mxu0 0
    %593 = vmatpush1.bf16.msra.mxu0 0
    %594 = vmatprep.subr.bf16.mxu0 0
    %595 = vmatpush1.bf16.msra.mxu0 0
    %596 = vmatprep.subr.bf16.mxu0 0
    %597 = vmatpush1.bf16.msra.mxu0 0
    %598 = vmatprep.subr.bf16.mxu0 0
    %599 = vmatpush1.bf16.msra.mxu0 0
    %600 = vmatprep.subr.bf16.mxu0 0
    %601 = vmatpush1.bf16.msra.mxu0 0
    %602 = vmatprep.mubr.bf16.mxu0 0
    %603 = vmatmul.mubr.bf16.gmra.mrb[0].mxu0 %v505
    %v604 = vpop.f32.mrb[0].mxu0
    %v605 = vadd.f32 0.0, %v604
    %v606 = vpop.f32.mrb[0].mxu0
    %v607 = vpop.f32.mrb[0].mxu0
    %v608 = vpop.f32.mrb[0].mxu0
    %609 = vdwg.mxu0
    %v610 = vld [vmem:[%s11] sm:$0x1]
    %v611 = vld [vmem:[%s12] sm:$0x1]
    %v612 = vrot.slane %v605, 4
    %v613 = vadd.f32 %v605, %v612
    %v614 = vrot.slane %v613, 2
    %v615 = vadd.f32 %v613, %v614
    %v616 = vrot.slane %v615, 1
    %v617 = vadd.f32 %v615, %v616
    %v618 = vmul.f32 %v617, %v178
    %v619 = vmul.f32 %v605, %v605
    %v620 = vrot.slane %v619, 4
    %v621 = vadd.f32 %v619, %v620
    %v622 = vrot.slane %v621, 2
    %v623 = vadd.f32 %v621, %v622
    %v624 = vrot.slane %v623, 1
    %v625 = vadd.f32 %v623, %v624
    %v626 = vmul.f32 %v625, %v178
    %v627 = vmul.f32 %v618, %v618
    %v628 = vsub.f32 %v626, %v627
    %v629 = vmax.f32 %v628, 0.0
    %v630 = vadd.f32 %v629, 1e-05
    %v631 = vrsqrt.pop %v630
    %v632 = vmul.f32 %v610, %v631
    %v633 = vmul.f32 %v618, %v632
    %v634 = vsub.f32 %v611, %v633
    %v636 = vlaneseq
    %v637 = vshrl.u32 %v636, 7
    %v638 = vsub.s32 0, %v637
    %v639 = vrot.slane %v632, %v638
    %v641 = vmul.f32 %v605, %v639
    %v643 = vlaneseq
    %v644 = vshrl.u32 %v643, 7
    %v645 = vsub.s32 0, %v644
    %v646 = vrot.slane %v634, %v645
    %v648 = vadd.f32 %v641, %v646
    %vm649 = vcmp.ge.f32.partialorder %v648, 0.0
    %v650 = vmul.f32 %v648, 0.01
    %v651 = vsel %vm649, %v648, %v650
    %v652 = vpack.c.bf16 %v651, %v651
    %v653 = vld [vmem:[%s13] sm:$0xf]
    %v654 = vld [vmem:[%s13 + $0x4] sm:$0xf]
    %v655 = vld [vmem:[%s13 + $0x8] sm:$0xf]
    %v656 = vld [vmem:[%s13 + $0xc] sm:$0xf]
    %v657 = vld [vmem:[%s13 + $0x10] sm:$0xf]
    %v658 = vld [vmem:[%s13 + $0x14] sm:$0xf]
    %v659 = vld [vmem:[%s13 + $0x18] sm:$0xf]
    %v660 = vld [vmem:[%s13 + $0x1c] sm:$0xf]
    %v661 = vld [vmem:[%s13 + $0x20] sm:$0xf]
    %v662 = vld [vmem:[%s13 + $0x24] sm:$0xf]
    %v663 = vld [vmem:[%s13 + $0x28] sm:$0xf]
    %v664 = vld [vmem:[%s13 + $0x2c] sm:$0xf]
    %v665 = vld [vmem:[%s13 + $0x30] sm:$0xf]
    %v666 = vld [vmem:[%s13 + $0x34] sm:$0xf]
    %v667 = vld [vmem:[%s13 + $0x38] sm:$0xf]
    %v668 = vld [vmem:[%s13 + $0x3c] sm:$0xf]
    %v685 = vunpack.c.l.b16 %v653
    %v686 = vunpack.c.l.b16 %v654
    %v687 = vunpack.c.l.b16 %v655
    %v688 = vunpack.c.l.b16 %v656
    %v689 = vunpack.c.l.b16 %v657
    %v690 = vunpack.c.l.b16 %v658
    %v691 = vunpack.c.l.b16 %v659
    %v692 = vunpack.c.l.b16 %v660
    %v693 = vunpack.c.l.b16 %v661
    %v694 = vunpack.c.l.b16 %v662
    %v695 = vunpack.c.l.b16 %v663
    %v696 = vunpack.c.l.b16 %v664
    %v697 = vunpack.c.l.b16 %v665
    %v698 = vunpack.c.l.b16 %v666
    %v699 = vunpack.c.l.b16 %v667
    %v700 = vunpack.c.l.b16 %v668
    %v701 = vpack.c.b16 %v686, %v685
    %v702 = vpack.c.b16 %v688, %v687
    %v703 = vpack.c.b16 %v690, %v689
    %v704 = vpack.c.b16 %v692, %v691
    %v705 = vpack.c.b16 %v694, %v693
    %v706 = vpack.c.b16 %v696, %v695
    %v707 = vpack.c.b16 %v698, %v697
    %v708 = vpack.c.b16 %v700, %v699
    %717 = vmatprep.subr.bf16.mxu0 0
    %718 = vmatpush1.bf16.msra.mxu0 %v701
    %719 = vmatprep.subr.bf16.mxu0 0
    %720 = vmatpush1.bf16.msra.mxu0 %v702
    %721 = vmatprep.subr.bf16.mxu0 0
    %722 = vmatpush1.bf16.msra.mxu0 %v703
    %723 = vmatprep.subr.bf16.mxu0 0
    %724 = vmatpush1.bf16.msra.mxu0 %v704
    %725 = vmatprep.subr.bf16.mxu0 0
    %726 = vmatpush1.bf16.msra.mxu0 %v705
    %727 = vmatprep.subr.bf16.mxu0 0
    %728 = vmatpush1.bf16.msra.mxu0 %v706
    %729 = vmatprep.subr.bf16.mxu0 0
    %730 = vmatpush1.bf16.msra.mxu0 %v707
    %731 = vmatprep.subr.bf16.mxu0 0
    %732 = vmatpush1.bf16.msra.mxu0 %v708
    %733 = vmatprep.subr.bf16.mxu0 0
    %734 = vmatpush1.bf16.msra.mxu0 0
    %735 = vmatprep.subr.bf16.mxu0 0
    %736 = vmatpush1.bf16.msra.mxu0 0
    %737 = vmatprep.subr.bf16.mxu0 0
    %738 = vmatpush1.bf16.msra.mxu0 0
    %739 = vmatprep.subr.bf16.mxu0 0
    %740 = vmatpush1.bf16.msra.mxu0 0
    %741 = vmatprep.subr.bf16.mxu0 0
    %742 = vmatpush1.bf16.msra.mxu0 0
    %743 = vmatprep.subr.bf16.mxu0 0
    %744 = vmatpush1.bf16.msra.mxu0 0
    %745 = vmatprep.subr.bf16.mxu0 0
    %746 = vmatpush1.bf16.msra.mxu0 0
    %747 = vmatprep.subr.bf16.mxu0 0
    %748 = vmatpush1.bf16.msra.mxu0 0
    %749 = vmatprep.mubr.bf16.mxu0 0
    %750 = vmatmul.mubr.bf16.gmra.mrb[0].mxu0 %v652
    %v751 = vpop.f32.mrb[0].mxu0
    %v752 = vadd.f32 0.0, %v751
    %v753 = vpop.f32.mrb[0].mxu0
    %v754 = vpop.f32.mrb[0].mxu0
    %v755 = vpop.f32.mrb[0].mxu0
    %756 = vdwg.mxu0
    %v757 = vld [vmem:[%s14] sm:$0x1]
    %v758 = vld [vmem:[%s15] sm:$0x1]
    %v759 = vrot.slane %v752, 4
    %v760 = vadd.f32 %v752, %v759
    %v761 = vrot.slane %v760, 2
    %v762 = vadd.f32 %v760, %v761
    %v763 = vrot.slane %v762, 1
    %v764 = vadd.f32 %v762, %v763
    %v765 = vmul.f32 %v764, %v178
    %v766 = vmul.f32 %v752, %v752
    %v767 = vrot.slane %v766, 4
    %v768 = vadd.f32 %v766, %v767
    %v769 = vrot.slane %v768, 2
    %v770 = vadd.f32 %v768, %v769
    %v771 = vrot.slane %v770, 1
    %v772 = vadd.f32 %v770, %v771
    %v773 = vmul.f32 %v772, %v178
    %v774 = vmul.f32 %v765, %v765
    %v775 = vsub.f32 %v773, %v774
    %v776 = vmax.f32 %v775, 0.0
    %v777 = vadd.f32 %v776, 1e-05
    %v778 = vrsqrt.pop %v777
    %v779 = vmul.f32 %v757, %v778
    %v780 = vmul.f32 %v765, %v779
    %v781 = vsub.f32 %v758, %v780
    %v783 = vlaneseq
    %v784 = vshrl.u32 %v783, 7
    %v785 = vsub.s32 0, %v784
    %v786 = vrot.slane %v779, %v785
    %v788 = vmul.f32 %v752, %v786
    %v790 = vlaneseq
    %v791 = vshrl.u32 %v790, 7
    %v792 = vsub.s32 0, %v791
    %v793 = vrot.slane %v781, %v792
    %v795 = vadd.f32 %v788, %v793
    %v796 = vld [vmem:[%s16] sm:$0xf]
    %v797 = vld [vmem:[%s16 + $0x4] sm:$0xf]
    %v798 = vld [vmem:[%s16 + $0x8] sm:$0xf]
    %v799 = vld [vmem:[%s16 + $0xc] sm:$0xf]
    %v800 = vld [vmem:[%s16 + $0x10] sm:$0xf]
    %v801 = vld [vmem:[%s16 + $0x14] sm:$0xf]
    %v802 = vld [vmem:[%s16 + $0x18] sm:$0xf]
    %v803 = vld [vmem:[%s16 + $0x1c] sm:$0xf]
    %v804 = vld [vmem:[%s16 + $0x20] sm:$0xf]
    %v805 = vld [vmem:[%s16 + $0x24] sm:$0xf]
    %v806 = vld [vmem:[%s16 + $0x28] sm:$0xf]
    %v807 = vld [vmem:[%s16 + $0x2c] sm:$0xf]
    %v808 = vld [vmem:[%s16 + $0x30] sm:$0xf]
    %v809 = vld [vmem:[%s16 + $0x34] sm:$0xf]
    %v810 = vld [vmem:[%s16 + $0x38] sm:$0xf]
    %v811 = vld [vmem:[%s16 + $0x3c] sm:$0xf]
    %v828 = vunpack.c.l.b16 %v796
    %v829 = vunpack.c.l.b16 %v797
    %v830 = vunpack.c.l.b16 %v798
    %v831 = vunpack.c.l.b16 %v799
    %v832 = vunpack.c.l.b16 %v800
    %v833 = vunpack.c.l.b16 %v801
    %v834 = vunpack.c.l.b16 %v802
    %v835 = vunpack.c.l.b16 %v803
    %v836 = vunpack.c.l.b16 %v804
    %v837 = vunpack.c.l.b16 %v805
    %v838 = vunpack.c.l.b16 %v806
    %v839 = vunpack.c.l.b16 %v807
    %v840 = vunpack.c.l.b16 %v808
    %v841 = vunpack.c.l.b16 %v809
    %v842 = vunpack.c.l.b16 %v810
    %v843 = vunpack.c.l.b16 %v811
    %v844 = vpack.c.b16 %v829, %v828
    %v845 = vpack.c.b16 %v831, %v830
    %v846 = vpack.c.b16 %v833, %v832
    %v847 = vpack.c.b16 %v835, %v834
    %v848 = vpack.c.b16 %v837, %v836
    %v849 = vpack.c.b16 %v839, %v838
    %v850 = vpack.c.b16 %v841, %v840
    %v851 = vpack.c.b16 %v843, %v842
    %860 = vmatprep.subr.bf16.mxu0 0
    %861 = vmatpush1.bf16.msra.mxu0 %v844
    %862 = vmatprep.subr.bf16.mxu0 0
    %863 = vmatpush1.bf16.msra.mxu0 %v845
    %864 = vmatprep.subr.bf16.mxu0 0
    %865 = vmatpush1.bf16.msra.mxu0 %v846
    %866 = vmatprep.subr.bf16.mxu0 0
    %867 = vmatpush1.bf16.msra.mxu0 %v847
    %868 = vmatprep.subr.bf16.mxu0 0
    %869 = vmatpush1.bf16.msra.mxu0 %v848
    %870 = vmatprep.subr.bf16.mxu0 0
    %871 = vmatpush1.bf16.msra.mxu0 %v849
    %872 = vmatprep.subr.bf16.mxu0 0
    %873 = vmatpush1.bf16.msra.mxu0 %v850
    %874 = vmatprep.subr.bf16.mxu0 0
    %875 = vmatpush1.bf16.msra.mxu0 %v851
    %876 = vmatprep.subr.bf16.mxu0 0
    %877 = vmatpush1.bf16.msra.mxu0 0
    %878 = vmatprep.subr.bf16.mxu0 0
    %879 = vmatpush1.bf16.msra.mxu0 0
    %880 = vmatprep.subr.bf16.mxu0 0
    %881 = vmatpush1.bf16.msra.mxu0 0
    %882 = vmatprep.subr.bf16.mxu0 0
    %883 = vmatpush1.bf16.msra.mxu0 0
    %884 = vmatprep.subr.bf16.mxu0 0
    %885 = vmatpush1.bf16.msra.mxu0 0
    %886 = vmatprep.subr.bf16.mxu0 0
    %887 = vmatpush1.bf16.msra.mxu0 0
    %888 = vmatprep.subr.bf16.mxu0 0
    %889 = vmatpush1.bf16.msra.mxu0 0
    %890 = vmatprep.subr.bf16.mxu0 0
    %891 = vmatpush1.bf16.msra.mxu0 0
    %892 = vmatprep.mubr.bf16.mxu0 0
    %893 = vmatmul.mubr.bf16.gmra.mrb[0].mxu0 %v505
    %v894 = vpop.f32.mrb[0].mxu0
    %v895 = vadd.f32 0.0, %v894
    %v896 = vpop.f32.mrb[0].mxu0
    %v897 = vpop.f32.mrb[0].mxu0
    %v898 = vpop.f32.mrb[0].mxu0
    %899 = vdwg.mxu0
    %v900 = vld [vmem:[%s17] sm:$0x1]
    %v901 = vld [vmem:[%s18] sm:$0x1]
    %v902 = vrot.slane %v895, 4
    %v903 = vadd.f32 %v895, %v902
    %v904 = vrot.slane %v903, 2
    %v905 = vadd.f32 %v903, %v904
    %v906 = vrot.slane %v905, 1
    %v907 = vadd.f32 %v905, %v906
    %v908 = vmul.f32 %v907, %v178
    %v909 = vmul.f32 %v895, %v895
    %v910 = vrot.slane %v909, 4
    %v911 = vadd.f32 %v909, %v910
    %v912 = vrot.slane %v911, 2
    %v913 = vadd.f32 %v911, %v912
    %v914 = vrot.slane %v913, 1
    %v915 = vadd.f32 %v913, %v914
    %v916 = vmul.f32 %v915, %v178
    %v917 = vmul.f32 %v908, %v908
    %v918 = vsub.f32 %v916, %v917
    %v919 = vmax.f32 %v918, 0.0
    %v920 = vadd.f32 %v919, 1e-05
    %v921 = vrsqrt.pop %v920
    %v922 = vmul.f32 %v900, %v921
    %v923 = vmul.f32 %v908, %v922
    %v924 = vsub.f32 %v901, %v923
    %v926 = vlaneseq
    %v927 = vshrl.u32 %v926, 7
    %v928 = vsub.s32 0, %v927
    %v929 = vrot.slane %v922, %v928
    %v931 = vmul.f32 %v895, %v929
    %v933 = vlaneseq
    %v934 = vshrl.u32 %v933, 7
    %v935 = vsub.s32 0, %v934
    %v936 = vrot.slane %v924, %v935
    %v938 = vadd.f32 %v931, %v936
    %v939 = vadd.f32 %v795, %v938
    %vm940 = vcmp.ge.f32.partialorder %v939, 0.0
    %v941 = vmul.f32 %v939, 0.01
    %v942 = vsel %vm940, %v939, %v941
    %943 = vst [vmem:[#allocation2] sm:$0xff] %v942
    // Predicated region
    $region78: #{forward.1} parent=1 // pred_check
      _
    $region79: #{forward.1} parent=1 // pred_check_branch
      %945 = sbr.rel (0) target = $region81
    $region80: #{forward.1} parent=1 // pred_region
      %s947 = ssub.s32 128, 128
      %948 = vsyncadd [#allocation3], %s947
      %s950 = sshll.u32 [#allocation2], 4
      %s951 = int_to_ptr.vmem [resolvable:$true] %s950
      %953 = dma.vmem_to_hbm [thread:$0]  %s951, 128, %s19, [#allocation3]
    $region81: #{forward.1} parent=1 // pred_fallthru
      _
    // Predicated region
    $region82: #{forward.1} parent=1 // pred_check
      _
    $region83: #{forward.1} parent=1 // pred_check_branch
      %955 = sbr.rel (0) target = $region85
    $region84: #{forward.1} parent=1 // pred_region
      %956 = dma.done [#allocation3], 128
    $region85: #{forward.1} parent=1 // pred_fallthru
      _
    %957 = vsyncpa [#allocation3], 1

</llo_original>
